<compile_context>
chip_gen: v7x
topology: tpu7x:2x2x1
jax: 0.10.0
libtpu: 0.0.40
codegen_flags: <defaults>
</compile_context>

<pallas_src>
import functools

import jax
import jax.numpy as jnp
from jax.experimental import pallas as pl
from jax.experimental.pallas import tpu as pltpu


def _cca_kernel(x_ref, w1t_ref, wdt_ref, wut_ref, o_ref, acc_ref, *, inv_hw):
    # x_ref  : (Nb, C_in, tile_hw)  chunk of x (channels on sublanes, HW on lanes)
    # w1t_ref: (C_in, C_out)   wdt_ref: (C_out, C_r)   wut_ref: (C_r, C_out)
    # o_ref  : (Nb, C_out)
    # acc_ref: (Nb, C_in) float32 running spatial sum (VMEM scratch)
    j = pl.program_id(1)

    @pl.when(j == 0)
    def _init():
        acc_ref[...] = jnp.zeros_like(acc_ref)

    # Partial spatial sum for this HW chunk.  Lane-axis reduce = vreg-wise VALU
    # adds (well under the 4-slot budget vs 3 vld) + one XLU cross-lane reduce;
    # this is free under the HBM-bound roofline and avoids the relayout copy a
    # (Nb*C_in, tile_hw) reshape-to-ones-matmul would require when C_in < 8.
    acc_ref[...] += jnp.sum(x_ref[...].astype(jnp.float32), axis=-1)

    @pl.when(j == pl.num_programs(1) - 1)
    def _finalize():
        # Pool-through-conv: g = mean_HW(x) @ w1^T  == mean_HW(conv1x1(x))
        g = jnp.dot(acc_ref[...] * inv_hw, w1t_ref[...],
                    preferred_element_type=jnp.float32)            # (Nb, C_out)
        d = jnp.maximum(
            jnp.dot(g, wdt_ref[...], preferred_element_type=jnp.float32), 0.0)
        u = jnp.dot(d, wut_ref[...], preferred_element_type=jnp.float32)
        o_ref[...] = jax.nn.sigmoid(u).astype(o_ref.dtype)


def _pick_tile_hw(hw, nb, c_in, itemsize, budget_bytes=4 * 1024 * 1024):
    """Largest multiple of 128 that divides HW and keeps one x buffer under
    ~4 MiB (so double-buffered x stays well inside every chip's scoped VMEM,
    including v7x's smaller budget). Falls back to the full HW extent when HW
    is not 128-aligned (block == full dim satisfies the (8,128) rule)."""
    if hw % 128 != 0:
        return hw
    c_pad = max(8, ((c_in + 7) // 8) * 8)          # sublane padding
    max_tile = max(128, budget_bytes // (nb * c_pad * itemsize))
    tile, t = 128, 128
    while t <= min(hw, max_tile):
        if hw % t == 0:
            tile = t
        t += 128
    return tile


def channel_contrast_attention(x_nchw, w1, wd, wu):
    """
    x_nchw: (N, C_in, H, W)
    w1:     (C_out, C_in)   -- conv1x1 weight (1x1 spatial squeezed)
    wd:     (C_r, C_out)    -- conv_down weight, C_r = C_out // 16
    wu:     (C_out, C_r)    -- conv_up weight
    returns (N, C_out, 1, 1)
    """
    N, C_in, H, W = x_nchw.shape
    C_out = w1.shape[0]
    C_r = wd.shape[0]
    HW = H * W

    # No HBM transpose: (N, C_in, H, W) -> (N, C_in, HW) is a free reshape.
    x = x_nchw.reshape(N, C_in, HW)
    w1t = jnp.asarray(w1).T          # (C_in, C_out)
    wdt = jnp.asarray(wd).T          # (C_out, C_r)
    wut = jnp.asarray(wu).T          # (C_r, C_out)

    # Batch blocking: >=8 rows per step when N allows it (sublane-dense output
    # stores, real MXU work in the squeeze/excite matmuls); otherwise one block
    # covering the whole batch (block == full dim is always legal).
    Nb = 8 if (N % 8 == 0) else N
    tile_hw = _pick_tile_hw(HW, Nb, C_in, x.dtype.itemsize)

    kernel = functools.partial(_cca_kernel, inv_hw=1.0 / float(HW))

    out = pl.pallas_call(
        kernel,
        out_shape=jax.ShapeDtypeStruct((N, C_out), x.dtype),
        grid_spec=pltpu.PrefetchScalarGridSpec(
            num_scalar_prefetch=0,
            grid=(N // Nb, HW // tile_hw),
            in_specs=[
                pl.BlockSpec((Nb, C_in, tile_hw), lambda i, j: (i, 0, j)),
                pl.BlockSpec((C_in, C_out), lambda i, j: (0, 0)),  # resident
                pl.BlockSpec((C_out, C_r), lambda i, j: (0, 0)),   # resident
                pl.BlockSpec((C_r, C_out), lambda i, j: (0, 0)),   # resident
            ],
            out_specs=pl.BlockSpec((Nb, C_out), lambda i, j: (i, 0)),
            scratch_shapes=[pltpu.VMEM((Nb, C_in), jnp.float32)],
        ),
        compiler_params=pltpu.CompilerParams(
            # batch axis parallel (2x on v7x's two TCs), HW reduction arbitrary
            dimension_semantics=("parallel", "arbitrary")),
    )(x, w1t, wdt, wut)

    return out.reshape(N, C_out, 1, 1)


def _reference(x_nchw, w1, wd, wu):
    # pure-JAX reference mirroring the PyTorch forward (conv -> pool -> SE)
    y = jnp.einsum("nchw,oc->nohw", x_nchw, w1)
    g = jnp.mean(y, axis=(2, 3))                       # (N, C_out)
    d = jnp.maximum(jnp.einsum("no,ro->nr", g, wd), 0.0)
    u = jnp.einsum("nr,or->no", d, wu)
    return jax.nn.sigmoid(u)[:, :, None, None]


if __name__ == "__main__":
    key = jax.random.PRNGKey(0)
    k_x, k_w1, k_wd, k_wu = jax.random.split(key, 4)

    N, C_in, H, W = 2, 4, 16, 16
    C_out = 32                       # must be >= 16 so C_out // 16 >= 1
    C_r = C_out // 16

    x = jax.random.normal(k_x, (N, C_in, H, W), dtype=jnp.float32)
    # deterministic synthetic weights (shapes match nn.Conv2d(..., 1) kernels)
    w1 = jax.random.normal(k_w1, (C_out, C_in), dtype=jnp.float32) * 0.1
    wd = jax.random.normal(k_wd, (C_r, C_out), dtype=jnp.float32) * 0.1
    wu = jax.random.normal(k_wu, (C_out, C_r), dtype=jnp.float32) * 0.1

    out = channel_contrast_attention(x, w1, wd, wu)
    out = jax.block_until_ready(out)

    ref = _reference(x, w1, wd, wu)
    assert out.shape == (N, C_out, 1, 1)
    assert jnp.allclose(out, ref, atol=1e-5, rtol=1e-5)
    print("KERNEL_OK")
</pallas_src>

<mosaic_0001>
module attributes {stable_mosaic.version = 11 : i64} {
  func.func @_cca_kernel(%arg0: i32, %arg1: i32, %arg2: memref<2x4x256xf32, #tpu.memory_space<vmem>>, %arg3: memref<4x32xf32, #tpu.memory_space<vmem>>, %arg4: memref<32x2xf32, #tpu.memory_space<vmem>>, %arg5: memref<2x32xf32, #tpu.memory_space<vmem>>, %arg6: memref<2x32xf32, #tpu.memory_space<vmem>>, %arg7: memref<2x4xf32, #tpu.memory_space<vmem>>) attributes {dimension_semantics = [#tpu.dimension_semantics<parallel>, #tpu.dimension_semantics<arbitrary>], iteration_bounds = array<i64: 1, 1>, scalar_prefetch = 0 : i64, scratch_operands = 1 : i64, tpu.core_type = #tpu.core_type<tc>, window_params = [{transform_indices = @transform_0, window_bounds = array<i64: 2, 4, 256>}, {pipeline_mode = #tpu.pipeline_mode<synchronous>, transform_indices = @transform_1, window_bounds = array<i64: 4, 32>}, {pipeline_mode = #tpu.pipeline_mode<synchronous>, transform_indices = @transform_2, window_bounds = array<i64: 32, 2>}, {pipeline_mode = #tpu.pipeline_mode<synchronous>, transform_indices = @transform_3, window_bounds = array<i64: 2, 32>}, {transform_indices = @transform_4, window_bounds = array<i64: 2, 32>}]} {
    %c0_i32 = arith.constant 0 : i32
    %0 = arith.cmpi eq, %arg1, %c0_i32 : i32
    %1 = arith.extui %0 : i1 to i32
    %c0_i32_0 = arith.constant 0 : i32
    %2 = arith.cmpi ne, %1, %c0_i32_0 : i32
    scf.if %2 {
      %cst_9 = arith.constant 0.000000e+00 : f32
      %11 = vector.broadcast %cst_9 : f32 to vector<2x4xf32>
      %c0_10 = arith.constant 0 : index
      %c0_11 = arith.constant 0 : index
      %12 = vector.load %arg7[%c0_10, %c0_11] : memref<2x4xf32, #tpu.memory_space<vmem>>, vector<2x4xf32>
      tpu.vector_store %arg7[%c0_10, %c0_11], %11 {strides = array<i32>} : memref<2x4xf32, #tpu.memory_space<vmem>>, vector<2x4xf32>,
    } else {
    }
    %c0 = arith.constant 0 : index
    %c0_1 = arith.constant 0 : index
    %3 = vector.load %arg7[%c0, %c0_1] : memref<2x4xf32, #tpu.memory_space<vmem>>, vector<2x4xf32>
    %c0_2 = arith.constant 0 : index
    %c0_3 = arith.constant 0 : index
    %c0_4 = arith.constant 0 : index
    %4 = vector.load %arg2[%c0_2, %c0_3, %c0_4] : memref<2x4x256xf32, #tpu.memory_space<vmem>>, vector<2x4x256xf32>
    %cst = arith.constant dense<0.000000e+00> : vector<2x4xf32>
    %5 = vector.multi_reduction <add>, %4, %cst [2] : vector<2x4x256xf32> to vector<2x4xf32>
    %6 = arith.addf %3, %5 : vector<2x4xf32>
    %c0_5 = arith.constant 0 : index
    %c0_6 = arith.constant 0 : index
    %7 = vector.load %arg7[%c0_5, %c0_6] : memref<2x4xf32, #tpu.memory_space<vmem>>, vector<2x4xf32>
    tpu.vector_store %arg7[%c0_5, %c0_6], %6 {strides = array<i32>} : memref<2x4xf32, #tpu.memory_space<vmem>>, vector<2x4xf32>,
    %c0_i32_7 = arith.constant 0 : i32
    %8 = arith.cmpi eq, %arg1, %c0_i32_7 : i32
    %9 = arith.extui %8 : i1 to i32
    %c0_i32_8 = arith.constant 0 : i32
    %10 = arith.cmpi ne, %9, %c0_i32_8 : i32
    scf.if %10 {
      %c0_9 = arith.constant 0 : index
      %c0_10 = arith.constant 0 : index
      %11 = vector.load %arg7[%c0_9, %c0_10] : memref<2x4xf32, #tpu.memory_space<vmem>>, vector<2x4xf32>
      %cst_11 = arith.constant 3.906250e-03 : f32
      %12 = vector.broadcast %cst_11 : f32 to vector<2x4xf32>
      %13 = arith.mulf %11, %12 : vector<2x4xf32>
      %c0_12 = arith.constant 0 : index
      %c0_13 = arith.constant 0 : index
      %14 = vector.load %arg3[%c0_12, %c0_13] : memref<4x32xf32, #tpu.memory_space<vmem>>, vector<4x32xf32>
      %cst_14 = arith.constant dense<0.000000e+00> : vector<2x32xf32>
      %15 = tpu.matmul %13, %14, %cst_14 {dimension_numbers = #tpu.dot_dimension_numbers<[1], [0], [0], [1], [0, 0, 1, 1], [], []>} : vector<2x4xf32>, vector<4x32xf32>, vector<2x32xf32> -> vector<2x32xf32>
      %c0_15 = arith.constant 0 : index
      %c0_16 = arith.constant 0 : index
      %16 = vector.load %arg4[%c0_15, %c0_16] : memref<32x2xf32, #tpu.memory_space<vmem>>, vector<32x2xf32>
      %cst_17 = arith.constant dense<0.000000e+00> : vector<2x2xf32>
      %17 = tpu.matmul %15, %16, %cst_17 {dimension_numbers = #tpu.dot_dimension_numbers<[1], [0], [0], [1], [0, 0, 1, 1], [], []>} : vector<2x32xf32>, vector<32x2xf32>, vector<2x2xf32> -> vector<2x2xf32>
      %cst_18 = arith.constant 0.000000e+00 : f32
      %18 = vector.broadcast %cst_18 : f32 to vector<2x2xf32>
      %19 = arith.maximumf %17, %18 : vector<2x2xf32>
      %c0_19 = arith.constant 0 : index
      %c0_20 = arith.constant 0 : index
      %20 = vector.load %arg5[%c0_19, %c0_20] : memref<2x32xf32, #tpu.memory_space<vmem>>, vector<2x32xf32>
      %cst_21 = arith.constant dense<0.000000e+00> : vector<2x32xf32>
      %21 = tpu.matmul %19, %20, %cst_21 {dimension_numbers = #tpu.dot_dimension_numbers<[1], [0], [0], [1], [0, 0, 1, 1], [], []>} : vector<2x2xf32>, vector<2x32xf32>, vector<2x32xf32> -> vector<2x32xf32>
      %22 = arith.negf %21 : vector<2x32xf32>
      %23 = math.exp %22 : vector<2x32xf32>
      %cst_22 = arith.constant 1.000000e+00 : f32
      %24 = vector.broadcast %cst_22 : f32 to vector<2x32xf32>
      %25 = arith.addf %24, %23 : vector<2x32xf32>
      %26 = arith.divf %24, %25 : vector<2x32xf32>
      %c0_23 = arith.constant 0 : index
      %c0_24 = arith.constant 0 : index
      %27 = vector.load %arg6[%c0_23, %c0_24] : memref<2x32xf32, #tpu.memory_space<vmem>>, vector<2x32xf32>
      tpu.vector_store %arg6[%c0_23, %c0_24], %26 {strides = array<i32>} : memref<2x32xf32, #tpu.memory_space<vmem>>, vector<2x32xf32>,
    } else {
    }
    return
  }
  func.func @transform_0(%arg0: i32, %arg1: i32) -> (i32, i32, i32) {
    %c0_i32 = arith.constant 0 : i32
    %c0_i32_0 = arith.constant 0 : i32
    return %arg0, %c0_i32, %arg1 : i32, i32, i32
  }
  func.func @transform_1(%arg0: i32, %arg1: i32) -> (i32, i32) {
    %c0_i32 = arith.constant 0 : i32
    %c0_i32_0 = arith.constant 0 : i32
    %c0_i32_1 = arith.constant 0 : i32
    return %c0_i32, %c0_i32_0 : i32, i32
  }
  func.func @transform_2(%arg0: i32, %arg1: i32) -> (i32, i32) {
    %c0_i32 = arith.constant 0 : i32
    %c0_i32_0 = arith.constant 0 : i32
    %c0_i32_1 = arith.constant 0 : i32
    return %c0_i32, %c0_i32_0 : i32, i32
  }
  func.func @transform_3(%arg0: i32, %arg1: i32) -> (i32, i32) {
    %c0_i32 = arith.constant 0 : i32
    %c0_i32_0 = arith.constant 0 : i32
    %c0_i32_1 = arith.constant 0 : i32
    return %c0_i32, %c0_i32_0 : i32, i32
  }
  func.func @transform_4(%arg0: i32, %arg1: i32) -> (i32, i32) {
    %c0_i32 = arith.constant 0 : i32
    %c0_i32_0 = arith.constant 0 : i32
    return %arg0, %c0_i32 : i32, i32
  }
}

</mosaic_0001>

<llo_original>
// kernel: tpu_custom_call.1
$region0: #{tpu_custom_call.1}
  #allocation0 [shape = 'u32[]', space=smem, size = 0x4, offset = 0x4, fixed_abs, tag = 'smem constant byte address 0x4 - core index']
  #allocation1 [shape = 'u32[144,128]{1,0:T(1,128)}', space=vmem, size = 0x12000, scoped, tag = 'internal scratch']
  #allocation2 [shape = 'f32[2,4]{1,0:T(2,128)}', space=vmem, size = 0x400, scoped, tag = 'scratch operand']
  %s0 = inlined_call_operand.vmem [shape: f32[2,4,256], index: 0, kind: input, shape index: {}]
  %s1 = inlined_call_operand.vmem [shape: f32[4,32], index: 1, kind: input, shape index: {}]
  %s2 = inlined_call_operand.vmem [shape: f32[32,2], index: 2, kind: input, shape index: {}]
  %s3 = inlined_call_operand.vmem [shape: f32[2,32], index: 3, kind: input, shape index: {}]
  %s4 = inlined_call_operand.hbm [shape: f32[2,32], index: 4, kind: output, shape index: {}]
  %s5 = sld [smem:[#allocation0]]
  $region34: #{tpu_custom_call.1} parent=0
    _
  %s7 = ssub.s32 1, %s5
  %s8 = scalar_select 0, %s7, %s5
  $region1: #{tpu_custom_call.1} parent=0
    #allocation3 [shape = 'u8[1024]{0}', space=vmem, size = 0x400, scoped, tag = 'output window, operand 0, single buffered']
    #allocation4 [shape = 's32[1]{0}', space=sflag, size = 0x4, scoped, tag = 'scoped memory for tpu_custom_call.1']
    %9 = vsyncpa [#allocation4], 0
    // Predicated region
    $region2: #{tpu_custom_call.1} parent=1 // pred_check
      _
    $region3: #{tpu_custom_call.1} parent=1 // pred_check_branch
      %11 = sbr.rel (0) target = $region5
    $region4: #{tpu_custom_call.1} parent=1 // pred_region
      _
    $region5: #{tpu_custom_call.1} parent=1 // pred_fallthru
      _
    // Predicated region
    $region6: #{tpu_custom_call.1} parent=1 // pred_check
      _
    $region7: #{tpu_custom_call.1} parent=1 // pred_check_branch
      %13 = sbr.rel (0) target = $region9
    $region8: #{tpu_custom_call.1} parent=1 // pred_region
      _
    $region9: #{tpu_custom_call.1} parent=1 // pred_fallthru
      _
    // Predicated region
    $region10: #{tpu_custom_call.1} parent=1 // pred_check
      _
    $region11: #{tpu_custom_call.1} parent=1 // pred_check_branch
      %15 = sbr.rel (0) target = $region13
    $region12: #{tpu_custom_call.1} parent=1 // pred_region
      _
    $region13: #{tpu_custom_call.1} parent=1 // pred_fallthru
      _
    // Predicated region
    $region14: #{tpu_custom_call.1} parent=1 // pred_check
      _
    $region15: #{tpu_custom_call.1} parent=1 // pred_check_branch
      %17 = sbr.rel (0) target = $region17
    $region16: #{tpu_custom_call.1} parent=1 // pred_region
      _
    $region17: #{tpu_custom_call.1} parent=1 // pred_fallthru
      _
    %p18 = scmp.eq.s32.totalorder 0, 0
    // Predicated region
    $region18: #{tpu_custom_call.1} parent=1 // pred_check
      %p19 = pneg %p18
    $region19: #{tpu_custom_call.1} parent=1 // pred_check_branch
      %21 = sbr.rel (%p19) target = $region21
    $region20: #{tpu_custom_call.1} parent=1 // pred_region
      %vm22 = vcmask 25600
      %23 = vst.msk [vmem:[#allocation2] sm:$0x3] %vm22, 0.0
    $region21: #{tpu_custom_call.1} parent=1 // pred_fallthru
      _
    %v24 = vld [vmem:[#allocation2] sm:$0x3]
    %v25 = vld [vmem:[%s0] sm:$0xff]
    %v26 = vld [vmem:[%s0 + $0x8] sm:$0xff]
    %v29 = vcombine.high %v25, %v25
    %v30 = vcombine.high %v26, %v26
    %vm33 = vcmask 1043456
    %v34 = vsel %vm33, %v25, 0.0
    %v35 = vsel %vm33, %v29, 0.0
    %v36 = vadd.f32 %v34, %v35
    %37 = vadd.xlane.f32.xlu0 %v36
    %v38 = vpop.xlane.xlu0 %37
    %v39 = vsel %vm33, %v26, 0.0
    %v40 = vsel %vm33, %v30, 0.0
    %v41 = vadd.f32 %v39, %v40
    %42 = vadd.xlane.f32.xlu0 %v41
    %v43 = vpop.xlane.xlu0 %42
    %v46 = vlaneseq
    %v47 = vand.u32 %v46, 127
    %v48 = vlaneseq
    %v49 = vshrl.u32 %v48, 7
    %v50 = vsub.s32 %v47, %v49
    %v51 = vrot.slane %v38, %v50
    %v52 = vlaneseq
    %v53 = vshrl.u32 %v52, 7
    %v54 = vsub.s32 %v47, %v53
    %v55 = vrot.slane %v43, %v54
    %vm56 = vcmask 1041409
    %v57 = vsel %vm56, %v55, %v51
    %v59 = vadd.f32 %v24, %v57
    %vm60 = vcmask 25600
    %61 = vst.msk [vmem:[#allocation2] sm:$0x3] %vm60, %v59
    // Predicated region
    $region22: #{tpu_custom_call.1} parent=1 // pred_check
      %p62 = pneg %p18
    $region23: #{tpu_custom_call.1} parent=1 // pred_check_branch
      %64 = sbr.rel (%p62) target = $region25
    $region24: #{tpu_custom_call.1} parent=1 // pred_region
      %v65 = vld [vmem:[#allocation2] sm:$0x3]
      %v66 = vmul.f32 %v65, 0.00390625
      %v67 = vld [vmem:[%s1] sm:$0xf]
      %vm68 = vcmask 31744
      %v70 = vsel %vm68, %v66, 0
      %v73 = vsel %vm33, %v67, 0
      %75 = vmatprep.subr.mxu0 0.0
      %76 = vmatpush1.msra.mxu0 %v73
      %77 = vmatprep.subr.mxu0 0.0
      %78 = vmatpush1.msra.mxu0 0.0
      %79 = vmatprep.subr.mxu0 0.0
      %80 = vmatpush1.msra.mxu0 0.0
      %81 = vmatprep.subr.mxu0 0.0
      %82 = vmatpush1.msra.mxu0 0.0
      %83 = vmatprep.subr.mxu0 0.0
      %84 = vmatpush1.msra.mxu0 0.0
      %85 = vmatprep.subr.mxu0 0.0
      %86 = vmatpush1.msra.mxu0 0.0
      %87 = vmatprep.subr.mxu0 0.0
      %88 = vmatpush1.msra.mxu0 0.0
      %89 = vmatprep.subr.mxu0 0.0
      %90 = vmatpush1.msra.mxu0 0.0
      %91 = vmatprep.subr.mxu0 0.0
      %92 = vmatpush1.msra.mxu0 0.0
      %93 = vmatprep.subr.mxu0 0.0
      %94 = vmatpush1.msra.mxu0 0.0
      %95 = vmatprep.subr.mxu0 0.0
      %96 = vmatpush1.msra.mxu0 0.0
      %97 = vmatprep.subr.mxu0 0.0
      %98 = vmatpush1.msra.mxu0 0.0
      %99 = vmatprep.subr.mxu0 0.0
      %100 = vmatpush1.msra.mxu0 0.0
      %101 = vmatprep.subr.mxu0 0.0
      %102 = vmatpush1.msra.mxu0 0.0
      %103 = vmatprep.subr.mxu0 0.0
      %104 = vmatpush1.msra.mxu0 0.0
      %105 = vmatprep.subr.mxu0 0.0
      %106 = vmatpush1.msra.mxu0 0.0
      %107 = vmatprep.subr.mxu0 0.0
      %108 = vmatpush1.msra.mxu0 0.0
      %109 = vmatprep.subr.mxu0 0.0
      %110 = vmatpush1.msra.mxu0 0.0
      %111 = vmatprep.subr.mxu0 0.0
      %112 = vmatpush1.msra.mxu0 0.0
      %113 = vmatprep.subr.mxu0 0.0
      %114 = vmatpush1.msra.mxu0 0.0
      %115 = vmatprep.subr.mxu0 0.0
      %116 = vmatpush1.msra.mxu0 0.0
      %117 = vmatprep.subr.mxu0 0.0
      %118 = vmatpush1.msra.mxu0 0.0
      %119 = vmatprep.subr.mxu0 0.0
      %120 = vmatpush1.msra.mxu0 0.0
      %121 = vmatprep.subr.mxu0 0.0
      %122 = vmatpush1.msra.mxu0 0.0
      %123 = vmatprep.subr.mxu0 0.0
      %124 = vmatpush1.msra.mxu0 0.0
      %125 = vmatprep.subr.mxu0 0.0
      %126 = vmatpush1.msra.mxu0 0.0
      %127 = vmatprep.subr.mxu0 0.0
      %128 = vmatpush1.msra.mxu0 0.0
      %129 = vmatprep.subr.mxu0 0.0
      %130 = vmatpush1.msra.mxu0 0.0
      %131 = vmatprep.subr.mxu0 0.0
      %132 = vmatpush1.msra.mxu0 0.0
      %133 = vmatprep.subr.mxu0 0.0
      %134 = vmatpush1.msra.mxu0 0.0
      %135 = vmatprep.subr.mxu0 0.0
      %136 = vmatpush1.msra.mxu0 0.0
      %137 = vmatprep.subr.mxu0 0.0
      %138 = vmatpush1.msra.mxu0 0.0
      %139 = vmatprep.mubr.f32.mxu0 0.0
      %140 = vmatmul.mubr.f32.gmra.mrb[0].mxu0 %v70
      %v141 = vpop.f32.mrb[0].mxu0
      %v142 = vadd.f32 0.0, %v141
      %v143 = vpop.f32.mrb[0].mxu0
      %144 = vdwg.mxu0
      %v145 = vld [vmem:[%s2] sm:$0xff]
      %v146 = vld [vmem:[%s2 + $0x8] sm:$0xff]
      %v147 = vld [vmem:[%s2 + $0x10] sm:$0xff]
      %v148 = vld [vmem:[%s2 + $0x18] sm:$0xff]
      %vm149 = vcmask 261120
      %v151 = vsel %vm149, %v142, 0
      %153 = vmatprep.subr.mxu0 0.0
      %154 = vmatpush1.msra.mxu0 %v145
      %155 = vmatprep.subr.mxu0 0.0
      %156 = vmatpush1.msra.mxu0 %v146
      %157 = vmatprep.subr.mxu0 0.0
      %158 = vmatpush1.msra.mxu0 %v147
      %159 = vmatprep.subr.mxu0 0.0
      %160 = vmatpush1.msra.mxu0 %v148
      %161 = vmatprep.subr.mxu0 0.0
      %162 = vmatpush1.msra.mxu0 0.0
      %163 = vmatprep.subr.mxu0 0.0
      %164 = vmatpush1.msra.mxu0 0.0
      %165 = vmatprep.subr.mxu0 0.0
      %166 = vmatpush1.msra.mxu0 0.0
      %167 = vmatprep.subr.mxu0 0.0
      %168 = vmatpush1.msra.mxu0 0.0
      %169 = vmatprep.subr.mxu0 0.0
      %170 = vmatpush1.msra.mxu0 0.0
      %171 = vmatprep.subr.mxu0 0.0
      %172 = vmatpush1.msra.mxu0 0.0
      %173 = vmatprep.subr.mxu0 0.0
      %174 = vmatpush1.msra.mxu0 0.0
      %175 = vmatprep.subr.mxu0 0.0
      %176 = vmatpush1.msra.mxu0 0.0
      %177 = vmatprep.subr.mxu0 0.0
      %178 = vmatpush1.msra.mxu0 0.0
      %179 = vmatprep.subr.mxu0 0.0
      %180 = vmatpush1.msra.mxu0 0.0
      %181 = vmatprep.subr.mxu0 0.0
      %182 = vmatpush1.msra.mxu0 0.0
      %183 = vmatprep.subr.mxu0 0.0
      %184 = vmatpush1.msra.mxu0 0.0
      %185 = vmatprep.subr.mxu0 0.0
      %186 = vmatpush1.msra.mxu0 0.0
      %187 = vmatprep.subr.mxu0 0.0
      %188 = vmatpush1.msra.mxu0 0.0
      %189 = vmatprep.subr.mxu0 0.0
      %190 = vmatpush1.msra.mxu0 0.0
      %191 = vmatprep.subr.mxu0 0.0
      %192 = vmatpush1.msra.mxu0 0.0
      %193 = vmatprep.subr.mxu0 0.0
      %194 = vmatpush1.msra.mxu0 0.0
      %195 = vmatprep.subr.mxu0 0.0
      %196 = vmatpush1.msra.mxu0 0.0
      %197 = vmatprep.subr.mxu0 0.0
      %198 = vmatpush1.msra.mxu0 0.0
      %199 = vmatprep.subr.mxu0 0.0
      %200 = vmatpush1.msra.mxu0 0.0
      %201 = vmatprep.subr.mxu0 0.0
      %202 = vmatpush1.msra.mxu0 0.0
      %203 = vmatprep.subr.mxu0 0.0
      %204 = vmatpush1.msra.mxu0 0.0
      %205 = vmatprep.subr.mxu0 0.0
      %206 = vmatpush1.msra.mxu0 0.0
      %207 = vmatprep.subr.mxu0 0.0
      %208 = vmatpush1.msra.mxu0 0.0
      %209 = vmatprep.subr.mxu0 0.0
      %210 = vmatpush1.msra.mxu0 0.0
      %211 = vmatprep.subr.mxu0 0.0
      %212 = vmatpush1.msra.mxu0 0.0
      %213 = vmatprep.subr.mxu0 0.0
      %214 = vmatpush1.msra.mxu0 0.0
      %215 = vmatprep.subr.mxu0 0.0
      %216 = vmatpush1.msra.mxu0 0.0
      %217 = vmatprep.mubr.f32.mxu0 0.0
      %218 = vmatmul.mubr.f32.gmra.mrb[0].mxu0 %v151
      %v219 = vpop.f32.mrb[0].mxu0
      %v220 = vadd.f32 0.0, %v219
      %v221 = vpop.f32.mrb[0].mxu0
      %222 = vdwg.mxu0
      %v223 = vmax.f32 %v220, 0.0
      %v224 = vld [vmem:[%s3] sm:$0x3]
      %vm225 = vcmask 15360
      %v227 = vsel %vm225, %v223, 0
      %vm229 = vcmask 1041408
      %v231 = vsel %vm229, %v224, 0
      %233 = vmatprep.subr.mxu0 0.0
      %234 = vmatpush1.msra.mxu0 %v231
      %235 = vmatprep.subr.mxu0 0.0
      %236 = vmatpush1.msra.mxu0 0.0
      %237 = vmatprep.subr.mxu0 0.0
      %238 = vmatpush1.msra.mxu0 0.0
      %239 = vmatprep.subr.mxu0 0.0
      %240 = vmatpush1.msra.mxu0 0.0
      %241 = vmatprep.subr.mxu0 0.0
      %242 = vmatpush1.msra.mxu0 0.0
      %243 = vmatprep.subr.mxu0 0.0
      %244 = vmatpush1.msra.mxu0 0.0
      %245 = vmatprep.subr.mxu0 0.0
      %246 = vmatpush1.msra.mxu0 0.0
      %247 = vmatprep.subr.mxu0 0.0
      %248 = vmatpush1.msra.mxu0 0.0
      %249 = vmatprep.subr.mxu0 0.0
      %250 = vmatpush1.msra.mxu0 0.0
      %251 = vmatprep.subr.mxu0 0.0
      %252 = vmatpush1.msra.mxu0 0.0
      %253 = vmatprep.subr.mxu0 0.0
      %254 = vmatpush1.msra.mxu0 0.0
      %255 = vmatprep.subr.mxu0 0.0
      %256 = vmatpush1.msra.mxu0 0.0
      %257 = vmatprep.subr.mxu0 0.0
      %258 = vmatpush1.msra.mxu0 0.0
      %259 = vmatprep.subr.mxu0 0.0
      %260 = vmatpush1.msra.mxu0 0.0
      %261 = vmatprep.subr.mxu0 0.0
      %262 = vmatpush1.msra.mxu0 0.0
      %263 = vmatprep.subr.mxu0 0.0
      %264 = vmatpush1.msra.mxu0 0.0
      %265 = vmatprep.subr.mxu0 0.0
      %266 = vmatpush1.msra.mxu0 0.0
      %267 = vmatprep.subr.mxu0 0.0
      %268 = vmatpush1.msra.mxu0 0.0
      %269 = vmatprep.subr.mxu0 0.0
      %270 = vmatpush1.msra.mxu0 0.0
      %271 = vmatprep.subr.mxu0 0.0
      %272 = vmatpush1.msra.mxu0 0.0
      %273 = vmatprep.subr.mxu0 0.0
      %274 = vmatpush1.msra.mxu0 0.0
      %275 = vmatprep.subr.mxu0 0.0
      %276 = vmatpush1.msra.mxu0 0.0
      %277 = vmatprep.subr.mxu0 0.0
      %278 = vmatpush1.msra.mxu0 0.0
      %279 = vmatprep.subr.mxu0 0.0
      %280 = vmatpush1.msra.mxu0 0.0
      %281 = vmatprep.subr.mxu0 0.0
      %282 = vmatpush1.msra.mxu0 0.0
      %283 = vmatprep.subr.mxu0 0.0
      %284 = vmatpush1.msra.mxu0 0.0
      %285 = vmatprep.subr.mxu0 0.0
      %286 = vmatpush1.msra.mxu0 0.0
      %287 = vmatprep.subr.mxu0 0.0
      %288 = vmatpush1.msra.mxu0 0.0
      %289 = vmatprep.subr.mxu0 0.0
      %290 = vmatpush1.msra.mxu0 0.0
      %291 = vmatprep.subr.mxu0 0.0
      %292 = vmatpush1.msra.mxu0 0.0
      %293 = vmatprep.subr.mxu0 0.0
      %294 = vmatpush1.msra.mxu0 0.0
      %295 = vmatprep.subr.mxu0 0.0
      %296 = vmatpush1.msra.mxu0 0.0
      %297 = vmatprep.mubr.f32.mxu0 0.0
      %298 = vmatmul.mubr.f32.gmra.mrb[0].mxu0 %v227
      %v299 = vpop.f32.mrb[0].mxu0
      %v300 = vadd.f32 0.0, %v299
      %v301 = vpop.f32.mrb[0].mxu0
      %302 = vdwg.mxu0
      %v303 = vxor.u32 %v300, 2147483648
      %v304 = vmul.f32 %v303, 1.442695
      %v305 = vpow.pop %v304
      %v306 = vadd.f32 %v305, 1.0
      %v307 = vrcp.pop %v306
      %v308 = vmul.f32 1.0, %v307
      %vm309 = vcmask 254976
      %310 = vst.msk [vmem:[#allocation3] sm:$0x3] %vm309, %v308
    $region25: #{tpu_custom_call.1} parent=1 // pred_fallthru
      _
    // Predicated region
    $region26: #{tpu_custom_call.1} parent=1 // pred_check
      _
    $region27: #{tpu_custom_call.1} parent=1 // pred_check_branch
      %312 = sbr.rel (0) target = $region29
    $region28: #{tpu_custom_call.1} parent=1 // pred_region
      %s314 = ssub.s32 32, 32
      %315 = vsyncadd [#allocation4], %s314
      %s317 = sshll.u32 [#allocation3], 4
      %s318 = int_to_ptr.vmem [resolvable:$true] %s317
      %320 = dma.vmem_to_hbm [thread:$0]  %s318, 32, %s4, [#allocation4]
    $region29: #{tpu_custom_call.1} parent=1 // pred_fallthru
      _
    // Predicated region
    $region30: #{tpu_custom_call.1} parent=1 // pred_check
      _
    $region31: #{tpu_custom_call.1} parent=1 // pred_check_branch
      %322 = sbr.rel (0) target = $region33
    $region32: #{tpu_custom_call.1} parent=1 // pred_region
      %323 = dma.done [#allocation4], 32
    $region33: #{tpu_custom_call.1} parent=1 // pred_fallthru
      _
    %324 = vsyncpa [#allocation4], 1

</llo_original>
